<compile_context>
chip_gen: v5e
topology: v5e:2x2
jax: 0.10.0
libtpu: 0.0.40
codegen_flags: <defaults>
</compile_context>

<pallas_src>
import functools

import jax
import jax.numpy as jnp
from jax.experimental import pallas as pl
from jax.experimental.pallas import tpu as pltpu


_LANE = 128      # fast (lane) axis of a vreg
_SUBLANE = 8     # slow (sublane) axis of a vreg


def _round_up(v, m):
    return ((v + m - 1) // m) * m


def _pad2d(a, rows, cols):
    r, c = a.shape
    return jnp.pad(a, ((0, rows - r), (0, cols - c)))


# ----------------------------------------------------------------------------
# Fused kernel: relu(x @ W1 + b1) @ W2 + b2, everything in VMEM.
# ----------------------------------------------------------------------------
def _disc_kernel(x_ref, w1_ref, b1_ref, w2_ref, b2_ref, o_ref):
    h = jnp.dot(x_ref[...], w1_ref[...], preferred_element_type=jnp.float32)
    h = jnp.maximum(h + b1_ref[...], 0.0)
    y = jnp.dot(h, w2_ref[...], preferred_element_type=jnp.float32) + b2_ref[...]
    o_ref[...] = y.astype(o_ref.dtype)


# ----------------------------------------------------------------------------
# Wrapper
# ----------------------------------------------------------------------------
@functools.partial(jax.jit, static_argnames=("tile_m",))
def discriminator_forward(params, x, *, tile_m=256):
    """Discriminator.forward: relu(x @ W1 + b1) @ W2 + b2 (single Pallas kernel)."""
    w1 = params["w1"].astype(jnp.float32)
    b1 = params["b1"].astype(jnp.float32).reshape(1, -1)
    w2 = params["w2"].astype(jnp.float32)
    b2 = params["b2"].astype(jnp.float32).reshape(1, -1)

    n, d_in = x.shape
    d_hid = w1.shape[1]
    d_out = w2.shape[1]

    # Lane/sublane-aligned (zero) padding -> unmasked vector loads/stores.
    in_p = _round_up(d_in, _LANE)
    hid_p = _round_up(d_hid, _LANE)
    out_p = _round_up(d_out, _LANE)

    w1_p = _pad2d(w1, in_p, hid_p)
    b1_p = _pad2d(b1, 1, hid_p)
    w2_p = _pad2d(w2, hid_p, out_p)
    b2_p = _pad2d(b2, 1, out_p)

    if n <= tile_m:
        # Small batch: one block, no grid, every operand pinned in VMEM.
        n_pad = _round_up(n, _SUBLANE)
        x_p = _pad2d(x.astype(jnp.float32), n_pad, in_p)
        vmem = pl.BlockSpec(memory_space=pltpu.MemorySpace.VMEM)
        y_p = pl.pallas_call(
            _disc_kernel,
            out_shape=jax.ShapeDtypeStruct((n_pad, out_p), jnp.float32),
            in_specs=[vmem, vmem, vmem, vmem, vmem],
            out_specs=vmem,
        )(x_p, w1_p, b1_p, w2_p, b2_p)
    else:
        # Large batch: tile the row (batch) dimension; "parallel" lets v7x
        # shard row tiles across its 2 TensorCores. Weights are re-fetched per
        # tile by the auto-pipeline (tiny vs. the row data).
        n_pad = _round_up(n, tile_m)
        x_p = _pad2d(x.astype(jnp.float32), n_pad, in_p)
        y_p = pl.pallas_call(
            _disc_kernel,
            out_shape=jax.ShapeDtypeStruct((n_pad, out_p), jnp.float32),
            grid=(n_pad // tile_m,),
            in_specs=[
                pl.BlockSpec((tile_m, in_p), lambda i: (i, 0)),
                pl.BlockSpec((in_p, hid_p), lambda i: (0, 0)),
                pl.BlockSpec((1, hid_p), lambda i: (0, 0)),
                pl.BlockSpec((hid_p, out_p), lambda i: (0, 0)),
                pl.BlockSpec((1, out_p), lambda i: (0, 0)),
            ],
            out_specs=pl.BlockSpec((tile_m, out_p), lambda i: (i, 0)),
            compiler_params=pltpu.CompilerParams(
                dimension_semantics=("parallel",)),
        )(x_p, w1_p, b1_p, w2_p, b2_p)

    # Strip padding (cheap XLA slice, fused under jit).
    return y_p[:n, :d_out]


# ----------------------------------------------------------------------------
# Pure-JAX reference
# ----------------------------------------------------------------------------
def _ref_forward(params, x):
    h = jnp.maximum(
        jnp.dot(x, params["w1"], precision=jax.lax.Precision.HIGHEST)
        + params["b1"], 0.0)
    return (jnp.dot(h, params["w2"], precision=jax.lax.Precision.HIGHEST)
            + params["b2"])


# ----------------------------------------------------------------------------
if __name__ == "__main__":
    IN_DIM, HID_DIM, OUT_DIM = 16, 32, 1   # Discriminator(input_dim, hidden_dim, output_dim)

    key = jax.random.PRNGKey(0)
    ks = jax.random.split(key, 6)
    params = {
        "w1": 0.1 * jax.random.normal(ks[0], (IN_DIM, HID_DIM), jnp.float32),
        "b1": 0.1 * jax.random.normal(ks[1], (HID_DIM,), jnp.float32),
        "w2": 0.1 * jax.random.normal(ks[2], (HID_DIM, OUT_DIM), jnp.float32),
        "b2": 0.1 * jax.random.normal(ks[3], (OUT_DIM,), jnp.float32),
    }

    # Small batch -> single fused, grid-less call (everything VMEM-resident).
    x_small = jax.random.normal(ks[4], (8, IN_DIM), jnp.float32)
    y_small = jax.block_until_ready(discriminator_forward(params, x_small))
    r_small = _ref_forward(params, x_small)
    assert y_small.shape == r_small.shape, (y_small.shape, r_small.shape)
    assert jnp.allclose(y_small, r_small, rtol=1e-2, atol=1e-2), "small-batch mismatch"

    # Larger batch -> row-tiled grid, parallel over TensorCores.
    x_big = jax.random.normal(ks[5], (512, IN_DIM), jnp.float32)
    y_big = jax.block_until_ready(discriminator_forward(params, x_big, tile_m=128))
    r_big = _ref_forward(params, x_big)
    assert y_big.shape == r_big.shape, (y_big.shape, r_big.shape)
    assert jnp.allclose(y_big, r_big, rtol=1e-2, atol=1e-2), "large-batch mismatch"

    print("KERNEL_OK")
</pallas_src>

<mosaic_0001>
module attributes {stable_mosaic.version = 11 : i64} {
  func.func @_disc_kernel(%arg0: memref<8x128xf32, #tpu.memory_space<vmem>>, %arg1: memref<128x128xf32, #tpu.memory_space<vmem>>, %arg2: memref<1x128xf32, #tpu.memory_space<vmem>>, %arg3: memref<128x128xf32, #tpu.memory_space<vmem>>, %arg4: memref<1x128xf32, #tpu.memory_space<vmem>>, %arg5: memref<8x128xf32, #tpu.memory_space<vmem>>) attributes {dimension_semantics = [], scalar_prefetch = 0 : i64, scratch_operands = 0 : i64, tpu.core_type = #tpu.core_type<tc>} {
    %c0 = arith.constant 0 : index
    %c0_0 = arith.constant 0 : index
    %0 = vector.load %arg0[%c0, %c0_0] : memref<8x128xf32, #tpu.memory_space<vmem>>, vector<8x128xf32>
    %c0_1 = arith.constant 0 : index
    %c0_2 = arith.constant 0 : index
    %1 = vector.load %arg1[%c0_1, %c0_2] : memref<128x128xf32, #tpu.memory_space<vmem>>, vector<128x128xf32>
    %cst = arith.constant dense<0.000000e+00> : vector<8x128xf32>
    %2 = tpu.matmul %0, %1, %cst {dimension_numbers = #tpu.dot_dimension_numbers<[1], [0], [0], [1], [0, 0, 1, 1], [], []>} : vector<8x128xf32>, vector<128x128xf32>, vector<8x128xf32> -> vector<8x128xf32>
    %c0_3 = arith.constant 0 : index
    %c0_4 = arith.constant 0 : index
    %3 = vector.load %arg2[%c0_3, %c0_4] : memref<1x128xf32, #tpu.memory_space<vmem>>, vector<1x128xf32>
    %4 = vector.broadcast %3 : vector<1x128xf32> to vector<8x128xf32>
    %5 = arith.addf %2, %4 : vector<8x128xf32>
    %cst_5 = arith.constant 0.000000e+00 : f32
    %6 = vector.broadcast %cst_5 : f32 to vector<8x128xf32>
    %7 = arith.maximumf %5, %6 : vector<8x128xf32>
    %c0_6 = arith.constant 0 : index
    %c0_7 = arith.constant 0 : index
    %8 = vector.load %arg3[%c0_6, %c0_7] : memref<128x128xf32, #tpu.memory_space<vmem>>, vector<128x128xf32>
    %cst_8 = arith.constant dense<0.000000e+00> : vector<8x128xf32>
    %9 = tpu.matmul %7, %8, %cst_8 {dimension_numbers = #tpu.dot_dimension_numbers<[1], [0], [0], [1], [0, 0, 1, 1], [], []>} : vector<8x128xf32>, vector<128x128xf32>, vector<8x128xf32> -> vector<8x128xf32>
    %c0_9 = arith.constant 0 : index
    %c0_10 = arith.constant 0 : index
    %10 = vector.load %arg4[%c0_9, %c0_10] : memref<1x128xf32, #tpu.memory_space<vmem>>, vector<1x128xf32>
    %11 = vector.broadcast %10 : vector<1x128xf32> to vector<8x128xf32>
    %12 = arith.addf %9, %11 : vector<8x128xf32>
    %c0_11 = arith.constant 0 : index
    %c0_12 = arith.constant 0 : index
    %13 = vector.load %arg5[%c0_11, %c0_12] : memref<8x128xf32, #tpu.memory_space<vmem>>, vector<8x128xf32>
    tpu.vector_store %arg5[%c0_11, %c0_12], %12 {strides = array<i32>} : memref<8x128xf32, #tpu.memory_space<vmem>>, vector<8x128xf32>,
    return
  }
}

</mosaic_0001>

<llo_original>
// kernel: discriminator_forward.1
$region0: #{discriminator_forward.1}
  #allocation0 [shape = 'u32[]', space=smem, size = 0x4, offset = 0x4, fixed_abs, tag = 'smem constant byte address 0x4 - core index']
  #allocation1 [shape = 'u32[72,128]{1,0:T(1,128)}', space=vmem, size = 0x9000, scoped, tag = 'internal scratch']
  %s0 = inlined_call_operand.vmem [shape: f32[8,128], index: 0, kind: input, shape index: {}]
  %s1 = inlined_call_operand.vmem [shape: f32[128,128], index: 1, kind: input, shape index: {}]
  %s2 = inlined_call_operand.vmem [shape: f32[1,128], index: 2, kind: input, shape index: {}]
  %s3 = inlined_call_operand.vmem [shape: f32[128,128], index: 3, kind: input, shape index: {}]
  %s4 = inlined_call_operand.vmem [shape: f32[1,128], index: 4, kind: input, shape index: {}]
  %s5 = inlined_call_operand.vmem [shape: f32[8,128], index: 5, kind: output, shape index: {}]
  %s6 = sld [smem:[#allocation0]]
  $region30: #{discriminator_forward.1} parent=0
    _
  %s8 = ssub.s32 1, %s6
  %s9 = scalar_select 0, %s8, %s6
  // Predicated region
  $region2: #{discriminator_forward.1} parent=0 // pred_check
    _
  $region3: #{discriminator_forward.1} parent=0 // pred_check_branch
    %11 = sbr.rel (0) target = $region5
  $region4: #{discriminator_forward.1} parent=0 // pred_region
    _
  $region5: #{discriminator_forward.1} parent=0 // pred_fallthru
    _
  // Predicated region
  $region6: #{discriminator_forward.1} parent=0 // pred_check
    _
  $region7: #{discriminator_forward.1} parent=0 // pred_check_branch
    %13 = sbr.rel (0) target = $region9
  $region8: #{discriminator_forward.1} parent=0 // pred_region
    _
  $region9: #{discriminator_forward.1} parent=0 // pred_fallthru
    _
  // Predicated region
  $region10: #{discriminator_forward.1} parent=0 // pred_check
    _
  $region11: #{discriminator_forward.1} parent=0 // pred_check_branch
    %15 = sbr.rel (0) target = $region13
  $region12: #{discriminator_forward.1} parent=0 // pred_region
    _
  $region13: #{discriminator_forward.1} parent=0 // pred_fallthru
    _
  // Predicated region
  $region14: #{discriminator_forward.1} parent=0 // pred_check
    _
  $region15: #{discriminator_forward.1} parent=0 // pred_check_branch
    %17 = sbr.rel (0) target = $region17
  $region16: #{discriminator_forward.1} parent=0 // pred_region
    _
  $region17: #{discriminator_forward.1} parent=0 // pred_fallthru
    _
  // Predicated region
  $region18: #{discriminator_forward.1} parent=0 // pred_check
    _
  $region19: #{discriminator_forward.1} parent=0 // pred_check_branch
    %19 = sbr.rel (0) target = $region21
  $region20: #{discriminator_forward.1} parent=0 // pred_region
    _
  $region21: #{discriminator_forward.1} parent=0 // pred_fallthru
    _
  %v20 = vld [vmem:[%s0] sm:$0xff]
  %v21 = vld [vmem:[%s1] sm:$0xff]
  %v22 = vld [vmem:[%s1 + $0x8] sm:$0xff]
  %v23 = vld [vmem:[%s1 + $0x10] sm:$0xff]
  %v24 = vld [vmem:[%s1 + $0x18] sm:$0xff]
  %v25 = vld [vmem:[%s1 + $0x20] sm:$0xff]
  %v26 = vld [vmem:[%s1 + $0x28] sm:$0xff]
  %v27 = vld [vmem:[%s1 + $0x30] sm:$0xff]
  %v28 = vld [vmem:[%s1 + $0x38] sm:$0xff]
  %v29 = vld [vmem:[%s1 + $0x40] sm:$0xff]
  %v30 = vld [vmem:[%s1 + $0x48] sm:$0xff]
  %v31 = vld [vmem:[%s1 + $0x50] sm:$0xff]
  %v32 = vld [vmem:[%s1 + $0x58] sm:$0xff]
  %v33 = vld [vmem:[%s1 + $0x60] sm:$0xff]
  %v34 = vld [vmem:[%s1 + $0x68] sm:$0xff]
  %v35 = vld [vmem:[%s1 + $0x70] sm:$0xff]
  %v36 = vld [vmem:[%s1 + $0x78] sm:$0xff]
  %v37 = vld [vmem:[%s2] sm:$0x1]
  %v39 = vperm.slane %v37, 0
  %41 = vmatpush.msra.mxu0 %v36
  %42 = vmatpush.msra.mxu0 %v35
  %43 = vmatpush.msra.mxu0 %v34
  %44 = vmatpush.msra.mxu0 %v33
  %45 = vmatpush.msra.mxu0 %v32
  %46 = vmatpush.msra.mxu0 %v31
  %47 = vmatpush.msra.mxu0 %v30
  %48 = vmatpush.msra.mxu0 %v29
  %49 = vmatpush.msra.mxu0 %v28
  %50 = vmatpush.msra.mxu0 %v27
  %51 = vmatpush.msra.mxu0 %v26
  %52 = vmatpush.msra.mxu0 %v25
  %53 = vmatpush.msra.mxu0 %v24
  %54 = vmatpush.msra.mxu0 %v23
  %55 = vmatpush.msra.mxu0 %v22
  %56 = vmatpush.msra.mxu0 %v21
  %57 = vmatmul.f32.gmra.mxu0 %v20
  %v58 = vpop.f32.mrf.mxu0
  %v59 = vadd.f32 %v39, %v58
  %60 = vdwg.mxu0
  %v61 = vmax.f32 %v59, 0.0
  %v62 = vld [vmem:[%s3] sm:$0xff]
  %v63 = vld [vmem:[%s3 + $0x8] sm:$0xff]
  %v64 = vld [vmem:[%s3 + $0x10] sm:$0xff]
  %v65 = vld [vmem:[%s3 + $0x18] sm:$0xff]
  %v66 = vld [vmem:[%s3 + $0x20] sm:$0xff]
  %v67 = vld [vmem:[%s3 + $0x28] sm:$0xff]
  %v68 = vld [vmem:[%s3 + $0x30] sm:$0xff]
  %v69 = vld [vmem:[%s3 + $0x38] sm:$0xff]
  %v70 = vld [vmem:[%s3 + $0x40] sm:$0xff]
  %v71 = vld [vmem:[%s3 + $0x48] sm:$0xff]
  %v72 = vld [vmem:[%s3 + $0x50] sm:$0xff]
  %v73 = vld [vmem:[%s3 + $0x58] sm:$0xff]
  %v74 = vld [vmem:[%s3 + $0x60] sm:$0xff]
  %v75 = vld [vmem:[%s3 + $0x68] sm:$0xff]
  %v76 = vld [vmem:[%s3 + $0x70] sm:$0xff]
  %v77 = vld [vmem:[%s3 + $0x78] sm:$0xff]
  %v78 = vld [vmem:[%s4] sm:$0x1]
  %v80 = vperm.slane %v78, 0
  %82 = vmatpush.msra.mxu0 %v77
  %83 = vmatpush.msra.mxu0 %v76
  %84 = vmatpush.msra.mxu0 %v75
  %85 = vmatpush.msra.mxu0 %v74
  %86 = vmatpush.msra.mxu0 %v73
  %87 = vmatpush.msra.mxu0 %v72
  %88 = vmatpush.msra.mxu0 %v71
  %89 = vmatpush.msra.mxu0 %v70
  %90 = vmatpush.msra.mxu0 %v69
  %91 = vmatpush.msra.mxu0 %v68
  %92 = vmatpush.msra.mxu0 %v67
  %93 = vmatpush.msra.mxu0 %v66
  %94 = vmatpush.msra.mxu0 %v65
  %95 = vmatpush.msra.mxu0 %v64
  %96 = vmatpush.msra.mxu0 %v63
  %97 = vmatpush.msra.mxu0 %v62
  %98 = vmatmul.f32.gmra.mxu0 %v61
  %v99 = vpop.f32.mrf.mxu0
  %v100 = vadd.f32 %v80, %v99
  %101 = vdwg.mxu0
  %102 = vst [vmem:[%s5] sm:$0xff] %v100
  // Predicated region
  $region22: #{discriminator_forward.1} parent=0 // pred_check
    _
  $region23: #{discriminator_forward.1} parent=0 // pred_check_branch
    %104 = sbr.rel (0) target = $region25
  $region24: #{discriminator_forward.1} parent=0 // pred_region
    _
  $region25: #{discriminator_forward.1} parent=0 // pred_fallthru
    _
  // Predicated region
  $region26: #{discriminator_forward.1} parent=0 // pred_check
    _
  $region27: #{discriminator_forward.1} parent=0 // pred_check_branch
    %106 = sbr.rel (0) target = $region29
  $region28: #{discriminator_forward.1} parent=0 // pred_region
    _
  $region29: #{discriminator_forward.1} parent=0 // pred_fallthru
    _

</llo_original>
